<compile_context>
chip_gen: v7x
topology: tpu7x:2x2x1
jax: 0.10.0
libtpu: 0.0.40
codegen_flags: <defaults>
</compile_context>

<pallas_src>
import jax
import jax.numpy as jnp
from jax.experimental import pallas as pl
from jax.experimental.pallas import tpu as pltpu


def _round_up(n, m):
    return ((n + m - 1) // m) * m


def _linear_kernel(x_ref, wt_ref, b_ref, o_ref):
    # x: [TM, Dp], wt: [Dp, Np], b: [1, Np]  ->  o: [TM, Np]
    x = x_ref[...]
    bias = b_ref[...]                               # read once; implicit [1,Np] broadcast
    acc = jnp.dot(x, wt_ref[...], preferred_element_type=jnp.float32)
    o_ref[...] = (acc + bias).astype(o_ref.dtype)


def logistic_regressor_forward(x, w, b, *, tm=128):
    """PyTorch Linear forward: x @ w.T + b.

    x: [B, D] float32, w: [N, D] (PyTorch [out, in]), b: [N].
    """
    B, D = x.shape
    N = w.shape[0]

    # Lane-dense padding (multiples of 128 on the last dim) and sublane-aligned
    # batch padding (multiple of 8, then of the batch tile).
    Dp = _round_up(D, 128)
    Np = _round_up(N, 128)
    Bp = _round_up(B, 8)
    tm = min(tm, Bp)
    Bp = _round_up(Bp, tm)

    xp = jnp.zeros((Bp, Dp), x.dtype).at[:B, :D].set(x)
    # Pad + pre-transpose the (tiny) weight once, outside the hot path.
    wtp = jnp.zeros((Dp, Np), w.dtype).at[:D, :N].set(w.T)
    bp = jnp.zeros((1, Np), jnp.float32).at[0, :N].set(b.astype(jnp.float32))

    grid = (Bp // tm,)
    out = pl.pallas_call(
        _linear_kernel,
        out_shape=jax.ShapeDtypeStruct((Bp, Np), x.dtype),
        grid=grid,
        in_specs=[
            pl.BlockSpec((tm, Dp), lambda i: (i, 0)),   # x: tiled over batch
            pl.BlockSpec((Dp, Np), lambda i: (0, 0)),   # Wt: replicated
            pl.BlockSpec((1, Np), lambda i: (0, 0)),    # bias: replicated
        ],
        out_specs=pl.BlockSpec((tm, Np), lambda i: (i, 0)),
        compiler_params=pltpu.CompilerParams(
            dimension_semantics=("parallel",),          # 2x on v7x dual-TC
            vmem_limit_bytes=64 * 1024 * 1024,
        ),
    )(xp, wtp, bp)

    # Strip padding back to the module's true output shape [B, 2].
    return out[:B, :N]


def logistic_regressor_reference(x, w, b):
    return x @ w.T + b


if __name__ == "__main__":
    key = jax.random.PRNGKey(0)
    B, D, N = 256, 32, 2          # batch=256 (2 batch tiles), input_dim=32, out=2

    kx, kw, kb = jax.random.split(key, 3)
    x = jax.random.normal(kx, (B, D), dtype=jnp.float32)
    # PyTorch Linear-style init: uniform(-1/sqrt(D), 1/sqrt(D))
    bound = 1.0 / (D ** 0.5)
    w = jax.random.uniform(kw, (N, D), dtype=jnp.float32, minval=-bound, maxval=bound)
    b = jax.random.uniform(kb, (N,), dtype=jnp.float32, minval=-bound, maxval=bound)

    out = jax.block_until_ready(logistic_regressor_forward(x, w, b))
    ref = logistic_regressor_reference(x, w, b)

    assert out.shape == (B, N), out.shape
    assert jnp.allclose(out, ref, atol=1e-5, rtol=1e-5), "mismatch vs reference"
    print("KERNEL_OK")
</pallas_src>

<mosaic_0001>
module attributes {stable_mosaic.version = 11 : i64} {
  func.func @_linear_kernel(%arg0: i32, %arg1: memref<128x128xf32, #tpu.memory_space<vmem>>, %arg2: memref<128x128xf32, #tpu.memory_space<vmem>>, %arg3: memref<1x128xf32, #tpu.memory_space<vmem>>, %arg4: memref<128x128xf32, #tpu.memory_space<vmem>>) attributes {dimension_semantics = [#tpu.dimension_semantics<parallel>], iteration_bounds = array<i64: 2>, scalar_prefetch = 0 : i64, scratch_operands = 0 : i64, tpu.core_type = #tpu.core_type<tc>, window_params = [{transform_indices = @transform_0, window_bounds = array<i64: 128, 128>}, {pipeline_mode = #tpu.pipeline_mode<synchronous>, transform_indices = @transform_1, window_bounds = array<i64: 128, 128>}, {pipeline_mode = #tpu.pipeline_mode<synchronous>, transform_indices = @transform_2, window_bounds = array<i64: 1, 128>}, {transform_indices = @transform_3, window_bounds = array<i64: 128, 128>}]} {
    %c0 = arith.constant 0 : index
    %c0_0 = arith.constant 0 : index
    %0 = vector.load %arg1[%c0, %c0_0] : memref<128x128xf32, #tpu.memory_space<vmem>>, vector<128x128xf32>
    %c0_1 = arith.constant 0 : index
    %c0_2 = arith.constant 0 : index
    %1 = vector.load %arg3[%c0_1, %c0_2] : memref<1x128xf32, #tpu.memory_space<vmem>>, vector<1x128xf32>
    %c0_3 = arith.constant 0 : index
    %c0_4 = arith.constant 0 : index
    %2 = vector.load %arg2[%c0_3, %c0_4] : memref<128x128xf32, #tpu.memory_space<vmem>>, vector<128x128xf32>
    %cst = arith.constant dense<0.000000e+00> : vector<128x128xf32>
    %3 = tpu.matmul %0, %2, %cst {dimension_numbers = #tpu.dot_dimension_numbers<[1], [0], [0], [1], [0, 0, 1, 1], [], []>} : vector<128x128xf32>, vector<128x128xf32>, vector<128x128xf32> -> vector<128x128xf32>
    %4 = vector.broadcast %1 : vector<1x128xf32> to vector<128x128xf32>
    %5 = arith.addf %3, %4 : vector<128x128xf32>
    %c0_5 = arith.constant 0 : index
    %c0_6 = arith.constant 0 : index
    %6 = vector.load %arg4[%c0_5, %c0_6] : memref<128x128xf32, #tpu.memory_space<vmem>>, vector<128x128xf32>
    tpu.vector_store %arg4[%c0_5, %c0_6], %5 {strides = array<i32>} : memref<128x128xf32, #tpu.memory_space<vmem>>, vector<128x128xf32>,
    return
  }
  func.func @transform_0(%arg0: i32) -> (i32, i32) {
    %c0_i32 = arith.constant 0 : i32
    %c0_i32_0 = arith.constant 0 : i32
    return %arg0, %c0_i32 : i32, i32
  }
  func.func @transform_1(%arg0: i32) -> (i32, i32) {
    %c0_i32 = arith.constant 0 : i32
    %c0_i32_0 = arith.constant 0 : i32
    %c0_i32_1 = arith.constant 0 : i32
    return %c0_i32, %c0_i32_0 : i32, i32
  }
  func.func @transform_2(%arg0: i32) -> (i32, i32) {
    %c0_i32 = arith.constant 0 : i32
    %c0_i32_0 = arith.constant 0 : i32
    %c0_i32_1 = arith.constant 0 : i32
    return %c0_i32, %c0_i32_0 : i32, i32
  }
  func.func @transform_3(%arg0: i32) -> (i32, i32) {
    %c0_i32 = arith.constant 0 : i32
    %c0_i32_0 = arith.constant 0 : i32
    return %arg0, %c0_i32 : i32, i32
  }
}

</mosaic_0001>

<llo_original>
// kernel: tpu_custom_call.1
$region0: #{tpu_custom_call.1}
  #allocation0 [shape = 'u32[]', space=smem, size = 0x4, offset = 0x4, fixed_abs, tag = 'smem constant byte address 0x4 - core index']
  #allocation1 [shape = 'u32[144,128]{1,0:T(1,128)}', space=vmem, size = 0x12000, scoped, tag = 'internal scratch']
  %s0 = inlined_call_operand.hbm [shape: f32[256,128], index: 0, kind: input, shape index: {}]
  %s1 = inlined_call_operand.hbm [shape: f32[128,128], index: 1, kind: input, shape index: {}]
  %s2 = inlined_call_operand.hbm [shape: f32[1,128], index: 2, kind: input, shape index: {}]
  %s3 = inlined_call_operand.hbm [shape: f32[256,128], index: 3, kind: output, shape index: {}]
  %s4 = sld [smem:[#allocation0]]
  $region57: #{tpu_custom_call.1} parent=0
    _
  %s6 = ssub.s32 1, %s4
  %s7 = scalar_select 0, %s6, %s4
  $region1: #{tpu_custom_call.1} parent=0
    #allocation2 [shape = 'u8[131072]{0}', space=vmem, size = 0x20000, scoped, tag = 'input window, operand 0']
    #allocation3 [shape = 's32[2]{0}', space=sflag, size = 0x8, scoped, tag = 'scoped memory for tpu_custom_call.1']
    #allocation4 [shape = 's32[2]{0}', space=sflag, size = 0x8, scoped, tag = 'scoped memory for tpu_custom_call.1']
    #allocation5 [shape = 'u8[65536]{0}', space=vmem, size = 0x10000, scoped, tag = 'input window, operand 1, single buffered']
    #allocation6 [shape = 's32[1]{0}', space=sflag, size = 0x4, scoped, tag = 'scoped memory for tpu_custom_call.1']
    #allocation7 [shape = 'u8[512]{0}', space=vmem, size = 0x400, scoped, tag = 'input window, operand 2, single buffered']
    #allocation8 [shape = 'u8[131072]{0}', space=vmem, size = 0x20000, scoped, tag = 'output window, operand 0']
    %8 = vsyncpa [#allocation3], 0
    %s9 = scalar_lea.sflag [#allocation3], 1
    %10 = vsyncpa %s9, 0
    %11 = vsyncpa [#allocation6], 0
    %12 = vsyncpa [#allocation4], 0
    %s13 = scalar_lea.sflag [#allocation4], 1
    %14 = vsyncpa %s13, 0
    loop: start=0, step=1, limit=4
    $region2: #{tpu_custom_call.1} parent=1 // loop_pre_header
      _
    $region3: #{tpu_custom_call.1} parent=1 // loop_header
      %s16 = sphi 0, %s20
      %p17 = scmp.ge.s32.totalorder %s16, 4
      %s26 = sphi 0, %s28
      %s29 = sphi 0, %s26
      %s30 = sphi 0, %s29
      %s46 = sphi 0, %s30
      %s50 = sphi 0, %s50
      %s52 = sphi 0, %s50
      %s53 = sphi 0, %s52
      %s67 = sphi 0, %s53
      %s71 = sphi 0, %s71
      %s73 = sphi 0, %s71
      %s74 = sphi 0, %s73
      %s88 = sphi 0, %s74
      %s94 = sphi 0, %s96
      %s97 = sphi 0, %s94
      %s98 = sphi 0, %s97
      %s114 = sphi 0, %s98
    $region4: #{tpu_custom_call.1} parent=1 // loop_header_branch
      %19 = sbr.rel (%p17) target = $region8
    $region5: #{tpu_custom_call.1} parent=1 // loop_body
      %s21 = ssub.s32 %s16, 1
      %s22 = ssub.s32 %s16, 2
      %s23 = sadd.s32 %s16, 1
      %s24 = ssub.s32 %s16, %s23
      %p25 = scmp.eq.s32.totalorder %s24, 0
      %s27 = sadd.s32 %s26, 1
      %s28 = scalar_select %p25, %s26, %s27
      %p31 = pneg %p25
      %p32 = scmp.eq.s32.totalorder %s16, 1
      %p33 = por %p31, %p32
      %p34 = scmp.ne.s32.totalorder %s26, %s29
      %p35 = scmp.eq.s32.totalorder %s16, 0
      %p36 = por %p34, %p35
      %p37 = scmp.ne.s32.totalorder %s26, %s29
      %p38 = scmp.eq.s32.totalorder %s21, 1
      %p39 = por %p37, %p38
      %p40 = scmp.ne.s32.totalorder %s29, %s30
      %p41 = scmp.eq.s32.totalorder %s21, 0
      %p42 = por %p40, %p41
      %p43 = scmp.ne.s32.totalorder %s29, %s30
      %p44 = scmp.eq.s32.totalorder %s22, 1
      %p45 = por %p43, %p44
      %p47 = scmp.ne.s32.totalorder %s30, %s46
      %p48 = scmp.eq.s32.totalorder %s22, 0
      %p49 = por %p47, %p48
      %s51 = sadd.s32 %s50, 1
      %p54 = scmp.eq.s32.totalorder %s16, 1
      %p55 = scmp.ne.s32.totalorder %s50, %s52
      %p56 = scmp.eq.s32.totalorder %s16, 0
      %p57 = por %p55, %p56
      %p58 = scmp.ne.s32.totalorder %s50, %s52
      %p59 = scmp.eq.s32.totalorder %s21, 1
      %p60 = por %p58, %p59
      %p61 = scmp.ne.s32.totalorder %s52, %s53
      %p62 = scmp.eq.s32.totalorder %s21, 0
      %p63 = por %p61, %p62
      %p64 = scmp.ne.s32.totalorder %s52, %s53
      %p65 = scmp.eq.s32.totalorder %s22, 1
      %p66 = por %p64, %p65
      %p68 = scmp.ne.s32.totalorder %s53, %s67
      %p69 = scmp.eq.s32.totalorder %s22, 0
      %p70 = por %p68, %p69
      %s72 = sadd.s32 %s71, 1
      %p75 = scmp.eq.s32.totalorder %s16, 1
      %p76 = scmp.ne.s32.totalorder %s71, %s73
      %p77 = scmp.eq.s32.totalorder %s16, 0
      %p78 = por %p76, %p77
      %p79 = scmp.ne.s32.totalorder %s71, %s73
      %p80 = scmp.eq.s32.totalorder %s21, 1
      %p81 = por %p79, %p80
      %p82 = scmp.ne.s32.totalorder %s73, %s74
      %p83 = scmp.eq.s32.totalorder %s21, 0
      %p84 = por %p82, %p83
      %p85 = scmp.ne.s32.totalorder %s73, %s74
      %p86 = scmp.eq.s32.totalorder %s22, 1
      %p87 = por %p85, %p86
      %p89 = scmp.ne.s32.totalorder %s74, %s88
      %p90 = scmp.eq.s32.totalorder %s22, 0
      %p91 = por %p89, %p90
      %s92 = ssub.s32 %s16, %s23
      %p93 = scmp.eq.s32.totalorder %s92, 0
      %s95 = sadd.s32 %s94, 1
      %s96 = scalar_select %p93, %s94, %s95
      %p99 = pneg %p93
      %p100 = scmp.eq.s32.totalorder %s16, 1
      %p101 = por %p99, %p100
      %p102 = scmp.ne.s32.totalorder %s94, %s97
      %p103 = scmp.eq.s32.totalorder %s16, 0
      %p104 = por %p102, %p103
      %p105 = scmp.ne.s32.totalorder %s94, %s97
      %p106 = scmp.eq.s32.totalorder %s21, 1
      %p107 = por %p105, %p106
      %p108 = scmp.ne.s32.totalorder %s97, %s98
      %p109 = scmp.eq.s32.totalorder %s21, 0
      %p110 = por %p108, %p109
      %p111 = scmp.ne.s32.totalorder %s97, %s98
      %p112 = scmp.eq.s32.totalorder %s22, 1
      %p113 = por %p111, %p112
      %p115 = scmp.ne.s32.totalorder %s98, %s114
      %p116 = scmp.eq.s32.totalorder %s22, 0
      %p117 = por %p115, %p116
      %p118 = scmp.le.s32.totalorder 1, %s16
      %p119 = scmp.lt.s32.totalorder %s16, 3
      %p120 = pnand %p118, %p119
      %p121 = pneg %p120
      // Predicated region
      $region9: #{tpu_custom_call.1} parent=5 // pred_check
        _
      $region10: #{tpu_custom_call.1} parent=5 // pred_check_branch
        %123 = sbr.rel (%p120) target = $region12
      $region11: #{tpu_custom_call.1} parent=5 // pred_region
        %s124 = ssub.s32 %s16, 1
        // Predicated region
        $region13: #{tpu_custom_call.1} parent=11 // pred_check
          %p125 = pneg %p63
        $region14: #{tpu_custom_call.1} parent=11 // pred_check_branch
          %127 = sbr.rel (%p125) target = $region16
        $region15: #{tpu_custom_call.1} parent=11 // pred_region
          %s129 = ssub.s32 2048, 2048
          %130 = vsyncadd [#allocation6], %s129
          %s131 = sshll.u32 [#allocation5], 4
          %s132 = int_to_ptr.vmem [resolvable:$true] %s131
          %137 = dma.hbm_to_vmem [thread:$0]  %s1, 2048, %s132, [#allocation6], 128, 128, 8
        $region16: #{tpu_custom_call.1} parent=11 // pred_fallthru
          _
        // Predicated region
        $region17: #{tpu_custom_call.1} parent=11 // pred_check
          %p138 = pneg %p84
        $region18: #{tpu_custom_call.1} parent=11 // pred_check_branch
          %140 = sbr.rel (%p138) target = $region20
        $region19: #{tpu_custom_call.1} parent=11 // pred_region
          %s142 = ssub.s32 16, 16
          %143 = vsyncadd [#allocation6], %s142
          %s145 = sshll.u32 [#allocation7], 4
          %s146 = int_to_ptr.vmem [resolvable:$true] %s145
          %148 = dma.hbm_to_vmem [thread:$0]  %s2, 16, %s146, [#allocation6]
        $region20: #{tpu_custom_call.1} parent=11 // pred_fallthru
          _
      $region12: #{tpu_custom_call.1} parent=5 // pred_fallthru
        _
      %p149 = scmp.lt.s32.totalorder %s16, 2
      // Predicated region
      $region21: #{tpu_custom_call.1} parent=5 // pred_check
        %p150 = pneg %p149
      $region22: #{tpu_custom_call.1} parent=5 // pred_check_branch
        %152 = sbr.rel (%p150) target = $region24
      $region23: #{tpu_custom_call.1} parent=5 // pred_region
        // Predicated region
        $region25: #{tpu_custom_call.1} parent=23 // pred_check
          %p153 = pneg %p36
        $region26: #{tpu_custom_call.1} parent=23 // pred_check_branch
          %155 = sbr.rel (%p153) target = $region28
        $region27: #{tpu_custom_call.1} parent=23 // pred_region
          %s156 = sand.u32 %s26, 1
          %s157 = scalar_lea.sflag [#allocation3], %s156
          %s158 = sand.u32 %s26, 1
          %s159 = smul.addr %s158, 128
          %s160 = scalar_lea.vmem [#allocation2], %s159
          %s161 = smul.u32 16, %s16
          %s163 = ssub.s32 2048, 2048
          %164 = vsyncadd %s157, %s163
          %s165 = smul.addr %s161, 128
          %s166 = scalar_lea.hbm %s0, %s165
          %s167 = sshll.u32 %s160, 4
          %s168 = int_to_ptr.vmem [resolvable:$true] %s167
          %173 = dma.hbm_to_vmem [thread:$0]  %s166, 2048, %s168, %s157, 128, 128, 8
        $region28: #{tpu_custom_call.1} parent=23 // pred_fallthru
          _
      $region24: #{tpu_custom_call.1} parent=5 // pred_fallthru
        _
      %p174 = scmp.le.s32.totalorder 1, %s16
      %p175 = scmp.lt.s32.totalorder %s16, 3
      %p176 = pnand %p174, %p175
      %p177 = pneg %p176
      // Predicated region
      $region29: #{tpu_custom_call.1} parent=5 // pred_check
        _
      $region30: #{tpu_custom_call.1} parent=5 // pred_check_branch
        %179 = sbr.rel (%p176) target = $region32
      $region31: #{tpu_custom_call.1} parent=5 // pred_region
        %s180 = ssub.s32 %s16, 1
        %s181 = sand.u32 %s29, 1
        %s182 = scalar_lea.sflag [#allocation3], %s181
        %s183 = sand.u32 %s29, 1
        %s184 = smul.addr %s183, 128
        %s185 = scalar_lea.vmem [#allocation2], %s184
        // Predicated region
        $region33: #{tpu_custom_call.1} parent=31 // pred_check
          %p186 = pneg %p42
        $region34: #{tpu_custom_call.1} parent=31 // pred_check_branch
          %188 = sbr.rel (%p186) target = $region36
        $region35: #{tpu_custom_call.1} parent=31 // pred_region
          %189 = dma.done %s182, 2048
        $region36: #{tpu_custom_call.1} parent=31 // pred_fallthru
          _
        // Predicated region
        $region37: #{tpu_custom_call.1} parent=31 // pred_check
          %p190 = pneg %p63
        $region38: #{tpu_custom_call.1} parent=31 // pred_check_branch
          %192 = sbr.rel (%p190) target = $region40
        $region39: #{tpu_custom_call.1} parent=31 // pred_region
          %193 = dma.done [#allocation6], 2048
        $region40: #{tpu_custom_call.1} parent=31 // pred_fallthru
          _
        // Predicated region
        $region41: #{tpu_custom_call.1} parent=31 // pred_check
          %p194 = pneg %p84
        $region42: #{tpu_custom_call.1} parent=31 // pred_check_branch
          %196 = sbr.rel (%p194) target = $region44
        $region43: #{tpu_custom_call.1} parent=31 // pred_region
          %197 = dma.done [#allocation6], 16
        $region44: #{tpu_custom_call.1} parent=31 // pred_fallthru
          _
        %s198 = sand.u32 %s29, 1
        %s199 = scalar_lea.sflag [#allocation3], %s198
        %s200 = sand.u32 %s29, 1
        %s201 = smul.addr %s200, 128
        %s202 = scalar_lea.vmem [#allocation2], %s201
        %p203 = pneg %p42
        %p204 = pneg %p39
        %p205 = pneg %p63
        %p206 = pneg %p60
        %p207 = pneg %p84
        %p208 = pneg %p81
        %p209 = pneg %p110
        %p210 = pneg %p107
        %s211 = sand.u32 %s97, 1
        %s212 = scalar_lea.sflag [#allocation4], %s211
        %s213 = sand.u32 %s97, 1
        %s214 = smul.addr %s213, 128
        %s215 = scalar_lea.vmem [#allocation8], %s214
        %s216 = smul.u32 16, %s21
        %s217 = smul.u32 16, %s21
        %v218 = vld [vmem:[%s185] sm:$0xff]
        %v219 = vld [vmem:[%s185 + $0x8] sm:$0xff]
        %v220 = vld [vmem:[%s185 + $0x10] sm:$0xff]
        %v221 = vld [vmem:[%s185 + $0x18] sm:$0xff]
        %v222 = vld [vmem:[%s185 + $0x20] sm:$0xff]
        %v223 = vld [vmem:[%s185 + $0x28] sm:$0xff]
        %v224 = vld [vmem:[%s185 + $0x30] sm:$0xff]
        %v225 = vld [vmem:[%s185 + $0x38] sm:$0xff]
        %v226 = vld [vmem:[%s185 + $0x40] sm:$0xff]
        %v227 = vld [vmem:[%s185 + $0x48] sm:$0xff]
        %v228 = vld [vmem:[%s185 + $0x50] sm:$0xff]
        %v229 = vld [vmem:[%s185 + $0x58] sm:$0xff]
        %v230 = vld [vmem:[%s185 + $0x60] sm:$0xff]
        %v231 = vld [vmem:[%s185 + $0x68] sm:$0xff]
        %v232 = vld [vmem:[%s185 + $0x70] sm:$0xff]
        %v233 = vld [vmem:[%s185 + $0x78] sm:$0xff]
        %v234 = vld [vmem:[#allocation7] sm:$0x1]
        %v235 = vld [vmem:[#allocation5] sm:$0xff]
        %v236 = vld [vmem:[#allocation5 + $0x8] sm:$0xff]
        %v237 = vld [vmem:[#allocation5 + $0x10] sm:$0xff]
        %v238 = vld [vmem:[#allocation5 + $0x18] sm:$0xff]
        %v239 = vld [vmem:[#allocation5 + $0x20] sm:$0xff]
        %v240 = vld [vmem:[#allocation5 + $0x28] sm:$0xff]
        %v241 = vld [vmem:[#allocation5 + $0x30] sm:$0xff]
        %v242 = vld [vmem:[#allocation5 + $0x38] sm:$0xff]
        %v243 = vld [vmem:[#allocation5 + $0x40] sm:$0xff]
        %v244 = vld [vmem:[#allocation5 + $0x48] sm:$0xff]
        %v245 = vld [vmem:[#allocation5 + $0x50] sm:$0xff]
        %v246 = vld [vmem:[#allocation5 + $0x58] sm:$0xff]
        %v247 = vld [vmem:[#allocation5 + $0x60] sm:$0xff]
        %v248 = vld [vmem:[#allocation5 + $0x68] sm:$0xff]
        %v249 = vld [vmem:[#allocation5 + $0x70] sm:$0xff]
        %v250 = vld [vmem:[#allocation5 + $0x78] sm:$0xff]
        %v252 = vlaneseq
        %v253 = vshrl.u32 %v252, 7
        %v254 = vsub.s32 0, %v253
        %v255 = vrot.slane %v234, %v254
        %257 = vmatprep.subr.mxu0 0.0
        %258 = vmatpush1.msra.mxu0 %v235
        %259 = vmatprep.subr.mxu0 0.0
        %260 = vmatpush1.msra.mxu0 %v236
        %261 = vmatprep.subr.mxu0 0.0
        %262 = vmatpush1.msra.mxu0 %v237
        %263 = vmatprep.subr.mxu0 0.0
        %264 = vmatpush1.msra.mxu0 %v238
        %265 = vmatprep.subr.mxu0 0.0
        %266 = vmatpush1.msra.mxu0 %v239
        %267 = vmatprep.subr.mxu0 0.0
        %268 = vmatpush1.msra.mxu0 %v240
        %269 = vmatprep.subr.mxu0 0.0
        %270 = vmatpush1.msra.mxu0 %v241
        %271 = vmatprep.subr.mxu0 0.0
        %272 = vmatpush1.msra.mxu0 %v242
        %273 = vmatprep.subr.mxu0 0.0
        %274 = vmatpush1.msra.mxu0 %v243
        %275 = vmatprep.subr.mxu0 0.0
        %276 = vmatpush1.msra.mxu0 %v244
        %277 = vmatprep.subr.mxu0 0.0
        %278 = vmatpush1.msra.mxu0 %v245
        %279 = vmatprep.subr.mxu0 0.0
        %280 = vmatpush1.msra.mxu0 %v246
        %281 = vmatprep.subr.mxu0 0.0
        %282 = vmatpush1.msra.mxu0 %v247
        %283 = vmatprep.subr.mxu0 0.0
        %284 = vmatpush1.msra.mxu0 %v248
        %285 = vmatprep.subr.mxu0 0.0
        %286 = vmatpush1.msra.mxu0 %v249
        %287 = vmatprep.subr.mxu0 0.0
        %288 = vmatpush1.msra.mxu0 %v250
        %289 = vmatprep.subr.mxu0 0.0
        %290 = vmatpush1.msra.mxu0 0.0
        %291 = vmatprep.subr.mxu0 0.0
        %292 = vmatpush1.msra.mxu0 0.0
        %293 = vmatprep.subr.mxu0 0.0
        %294 = vmatpush1.msra.mxu0 0.0
        %295 = vmatprep.subr.mxu0 0.0
        %296 = vmatpush1.msra.mxu0 0.0
        %297 = vmatprep.subr.mxu0 0.0
        %298 = vmatpush1.msra.mxu0 0.0
        %299 = vmatprep.subr.mxu0 0.0
        %300 = vmatpush1.msra.mxu0 0.0
        %301 = vmatprep.subr.mxu0 0.0
        %302 = vmatpush1.msra.mxu0 0.0
        %303 = vmatprep.subr.mxu0 0.0
        %304 = vmatpush1.msra.mxu0 0.0
        %305 = vmatprep.subr.mxu0 0.0
        %306 = vmatpush1.msra.mxu0 0.0
        %307 = vmatprep.subr.mxu0 0.0
        %308 = vmatpush1.msra.mxu0 0.0
        %309 = vmatprep.subr.mxu0 0.0
        %310 = vmatpush1.msra.mxu0 0.0
        %311 = vmatprep.subr.mxu0 0.0
        %312 = vmatpush1.msra.mxu0 0.0
        %313 = vmatprep.subr.mxu0 0.0
        %314 = vmatpush1.msra.mxu0 0.0
        %315 = vmatprep.subr.mxu0 0.0
        %316 = vmatpush1.msra.mxu0 0.0
        %317 = vmatprep.subr.mxu0 0.0
        %318 = vmatpush1.msra.mxu0 0.0
        %319 = vmatprep.subr.mxu0 0.0
        %320 = vmatpush1.msra.mxu0 0.0
        %321 = vmatprep.mubr.f32.mxu0 0.0
        %322 = vmatmul.mubr.f32.gmra.mrb[0].mxu0 %v218
        %v323 = vpop.f32.mrb[0].mxu0
        %v324 = vadd.f32 %v255, %v323
        %v325 = vpop.f32.mrb[0].mxu0
        %326 = vmatprep.mubr.f32.mxu0 0.0
        %327 = vmatmul.mubr.f32.gmra.mrb[0].mxu0 %v219
        %v328 = vpop.f32.mrb[0].mxu0
        %v329 = vadd.f32 %v255, %v328
        %v330 = vpop.f32.mrb[0].mxu0
        %331 = vmatprep.mubr.f32.mxu0 0.0
        %332 = vmatmul.mubr.f32.gmra.mrb[0].mxu0 %v220
        %v333 = vpop.f32.mrb[0].mxu0
        %v334 = vadd.f32 %v255, %v333
        %v335 = vpop.f32.mrb[0].mxu0
        %336 = vmatprep.mubr.f32.mxu0 0.0
        %337 = vmatmul.mubr.f32.gmra.mrb[0].mxu0 %v221
        %v338 = vpop.f32.mrb[0].mxu0
        %v339 = vadd.f32 %v255, %v338
        %v340 = vpop.f32.mrb[0].mxu0
        %341 = vmatprep.mubr.f32.mxu0 0.0
        %342 = vmatmul.mubr.f32.gmra.mrb[0].mxu0 %v222
        %v343 = vpop.f32.mrb[0].mxu0
        %v344 = vadd.f32 %v255, %v343
        %v345 = vpop.f32.mrb[0].mxu0
        %346 = vmatprep.mubr.f32.mxu0 0.0
        %347 = vmatmul.mubr.f32.gmra.mrb[0].mxu0 %v223
        %v348 = vpop.f32.mrb[0].mxu0
        %v349 = vadd.f32 %v255, %v348
        %v350 = vpop.f32.mrb[0].mxu0
        %351 = vmatprep.mubr.f32.mxu0 0.0
        %352 = vmatmul.mubr.f32.gmra.mrb[0].mxu0 %v224
        %v353 = vpop.f32.mrb[0].mxu0
        %v354 = vadd.f32 %v255, %v353
        %v355 = vpop.f32.mrb[0].mxu0
        %356 = vmatprep.mubr.f32.mxu0 0.0
        %357 = vmatmul.mubr.f32.gmra.mrb[0].mxu0 %v225
        %v358 = vpop.f32.mrb[0].mxu0
        %v359 = vadd.f32 %v255, %v358
        %v360 = vpop.f32.mrb[0].mxu0
        %361 = vmatprep.mubr.f32.mxu0 0.0
        %362 = vmatmul.mubr.f32.gmra.mrb[0].mxu0 %v226
        %v363 = vpop.f32.mrb[0].mxu0
        %v364 = vadd.f32 %v255, %v363
        %v365 = vpop.f32.mrb[0].mxu0
        %366 = vmatprep.mubr.f32.mxu0 0.0
        %367 = vmatmul.mubr.f32.gmra.mrb[0].mxu0 %v227
        %v368 = vpop.f32.mrb[0].mxu0
        %v369 = vadd.f32 %v255, %v368
        %v370 = vpop.f32.mrb[0].mxu0
        %371 = vmatprep.mubr.f32.mxu0 0.0
        %372 = vmatmul.mubr.f32.gmra.mrb[0].mxu0 %v228
        %v373 = vpop.f32.mrb[0].mxu0
        %v374 = vadd.f32 %v255, %v373
        %v375 = vpop.f32.mrb[0].mxu0
        %376 = vmatprep.mubr.f32.mxu0 0.0
        %377 = vmatmul.mubr.f32.gmra.mrb[0].mxu0 %v229
        %v378 = vpop.f32.mrb[0].mxu0
        %v379 = vadd.f32 %v255, %v378
        %v380 = vpop.f32.mrb[0].mxu0
        %381 = vmatprep.mubr.f32.mxu0 0.0
        %382 = vmatmul.mubr.f32.gmra.mrb[0].mxu0 %v230
        %v383 = vpop.f32.mrb[0].mxu0
        %v384 = vadd.f32 %v255, %v383
        %v385 = vpop.f32.mrb[0].mxu0
        %386 = vmatprep.mubr.f32.mxu0 0.0
        %387 = vmatmul.mubr.f32.gmra.mrb[0].mxu0 %v231
        %v388 = vpop.f32.mrb[0].mxu0
        %v389 = vadd.f32 %v255, %v388
        %v390 = vpop.f32.mrb[0].mxu0
        %391 = vmatprep.mubr.f32.mxu0 0.0
        %392 = vmatmul.mubr.f32.gmra.mrb[0].mxu0 %v232
        %v393 = vpop.f32.mrb[0].mxu0
        %v394 = vadd.f32 %v255, %v393
        %v395 = vpop.f32.mrb[0].mxu0
        %396 = vmatprep.mubr.f32.mxu0 0.0
        %397 = vmatmul.mubr.f32.gmra.mrb[0].mxu0 %v233
        %v398 = vpop.f32.mrb[0].mxu0
        %v399 = vadd.f32 %v255, %v398
        %v400 = vpop.f32.mrb[0].mxu0
        %401 = vdwg.mxu0
        %402 = vst [vmem:[%s215] sm:$0xff] %v324
        %403 = vst [vmem:[%s215 + $0x8] sm:$0xff] %v329
        %404 = vst [vmem:[%s215 + $0x10] sm:$0xff] %v334
        %405 = vst [vmem:[%s215 + $0x18] sm:$0xff] %v339
        %406 = vst [vmem:[%s215 + $0x20] sm:$0xff] %v344
        %407 = vst [vmem:[%s215 + $0x28] sm:$0xff] %v349
        %408 = vst [vmem:[%s215 + $0x30] sm:$0xff] %v354
        %409 = vst [vmem:[%s215 + $0x38] sm:$0xff] %v359
        %410 = vst [vmem:[%s215 + $0x40] sm:$0xff] %v364
        %411 = vst [vmem:[%s215 + $0x48] sm:$0xff] %v369
        %412 = vst [vmem:[%s215 + $0x50] sm:$0xff] %v374
        %413 = vst [vmem:[%s215 + $0x58] sm:$0xff] %v379
        %414 = vst [vmem:[%s215 + $0x60] sm:$0xff] %v384
        %415 = vst [vmem:[%s215 + $0x68] sm:$0xff] %v389
        %416 = vst [vmem:[%s215 + $0x70] sm:$0xff] %v394
        %417 = vst [vmem:[%s215 + $0x78] sm:$0xff] %v399
        %s418 = sand.u32 %s97, 1
        %s419 = scalar_lea.sflag [#allocation4], %s418
        %s420 = sand.u32 %s97, 1
        %s421 = smul.addr %s420, 128
        %s422 = scalar_lea.vmem [#allocation8], %s421
        // Predicated region
        $region45: #{tpu_custom_call.1} parent=31 // pred_check
          %p423 = pneg %p107
        $region46: #{tpu_custom_call.1} parent=31 // pred_check_branch
          %425 = sbr.rel (%p423) target = $region48
        $region47: #{tpu_custom_call.1} parent=31 // pred_region
          %s426 = smul.u32 16, %s21
          %s428 = ssub.s32 2048, 2048
          %429 = vsyncadd %s419, %s428
          %s430 = smul.addr %s426, 128
          %s431 = scalar_lea.hbm %s3, %s430
          %s432 = sshll.u32 %s422, 4
          %s433 = int_to_ptr.vmem [resolvable:$true] %s432
          %438 = dma.vmem_to_hbm [thread:$0]  %s433, 2048, %s431, %s419, 128, 128, 8
        $region48: #{tpu_custom_call.1} parent=31 // pred_fallthru
          _
      $region32: #{tpu_custom_call.1} parent=5 // pred_fallthru
        _
      %p439 = scmp.le.s32.totalorder 2, %s16
      // Predicated region
      $region49: #{tpu_custom_call.1} parent=5 // pred_check
        %p440 = pneg %p439
      $region50: #{tpu_custom_call.1} parent=5 // pred_check_branch
        %442 = sbr.rel (%p440) target = $region52
      $region51: #{tpu_custom_call.1} parent=5 // pred_region
        %s443 = ssub.s32 %s16, 2
        // Predicated region
        $region53: #{tpu_custom_call.1} parent=51 // pred_check
          %p444 = pneg %p113
        $region54: #{tpu_custom_call.1} parent=51 // pred_check_branch
          %446 = sbr.rel (%p444) target = $region56
        $region55: #{tpu_custom_call.1} parent=51 // pred_region
          %s447 = sand.u32 %s98, 1
          %s448 = scalar_lea.sflag [#allocation4], %s447
          %s449 = sand.u32 %s98, 1
          %s450 = smul.addr %s449, 128
          %s451 = scalar_lea.vmem [#allocation8], %s450
          %452 = dma.done %s448, 2048
        $region56: #{tpu_custom_call.1} parent=51 // pred_fallthru
          _
      $region52: #{tpu_custom_call.1} parent=5 // pred_fallthru
        _
    $region6: #{tpu_custom_call.1} parent=1 // loop_footer
      %s20 = sadd.s32 1, %s16
    $region7: #{tpu_custom_call.1} parent=1 // loop_footer_branch
      %15 = sbr.rel target = $region3
    $region8: #{tpu_custom_call.1} parent=1 // loop_exit
      _
    %453 = vsyncpa [#allocation3], 1
    %s454 = scalar_lea.sflag [#allocation3], 1
    %455 = vsyncpa %s454, 1
    %456 = vsyncpa [#allocation6], 1
    %457 = vsyncpa [#allocation4], 1
    %s458 = scalar_lea.sflag [#allocation4], 1
    %459 = vsyncpa %s458, 1

</llo_original>
